<compile_context>
chip_gen: v5e
topology: v5e:2x2
jax: 0.10.0
libtpu: 0.0.40
codegen_flags: <defaults>
</compile_context>

<pallas_src>
import functools

import jax
import jax.numpy as jnp
from jax.experimental import pallas as pl
from jax.experimental.pallas import tpu as pltpu


# ---------------------------------------------------------------------------
# Fused Pallas kernel: the entire GCNNet2 forward on VMEM-resident operands.
# ---------------------------------------------------------------------------
def _make_fused_kernel(n_layers):
    """Build a kernel for a variable number of GCN layers.

    Ref order: x, adj, pool, emb_wT, emb_b, [wT_l, b_l] * n_layers,
               readout_wT, out.
    """

    def kernel(*refs):
        (x_ref, adj_ref, pool_ref, emb_wT_ref, emb_b_ref), rest = refs[:5], refs[5:]
        layer_refs = rest[: 2 * n_layers]
        readout_wT_ref = rest[2 * n_layers]
        o_ref = rest[2 * n_layers + 1]

        f32 = jnp.float32
        adj = adj_ref[...]

        # embedding_h:  h = x @ W_emb^T + b_emb
        h = (
            jnp.dot(x_ref[...], emb_wT_ref[...], preferred_element_type=f32)
            + emb_b_ref[...]
        )

        # GCN layers (unrolled at trace time):  h = relu(A @ (h @ W^T) + b)
        for l in range(n_layers):
            wT = layer_refs[2 * l][...]
            b = layer_refs[2 * l + 1][...]
            xw = jnp.dot(h, wT, preferred_element_type=f32)          # GCNConv.lin
            h = jnp.maximum(
                jnp.dot(adj, xw, preferred_element_type=f32) + b, 0.0
            )

        # global_mean_pool + readout_mlp folded:  logits = (P @ h) @ W_out^T
        hg = jnp.dot(pool_ref[...], h, preferred_element_type=f32)
        o_ref[...] = jnp.dot(
            hg, readout_wT_ref[...], preferred_element_type=f32
        ).astype(o_ref.dtype)

    return kernel


# ---------------------------------------------------------------------------
# Parameters.
# ---------------------------------------------------------------------------
def init_params(key, in_dim, hidden_dims, n_classes):
    params = {}

    def linear(key, fan_in, fan_out, with_bias=True):
        k1, k2 = jax.random.split(key)
        bound = 1.0 / jnp.sqrt(jnp.float32(fan_in))
        w = jax.random.uniform(k1, (fan_out, fan_in), jnp.float32, -bound, bound)
        b = (
            jax.random.uniform(k2, (fan_out,), jnp.float32, -bound, bound)
            if with_bias
            else None
        )
        return w, b

    keys = jax.random.split(key, 2 + len(hidden_dims))
    params["emb_w"], params["emb_b"] = linear(keys[0], in_dim, in_dim)

    gcn = []
    _in = in_dim
    for i, h in enumerate(hidden_dims):
        # PyG GCNConv: lin = Linear(in, out, bias=False); separate bias added
        # after aggregation (initialized to zeros).
        w, _ = linear(keys[1 + i], _in, h, with_bias=False)
        b = jnp.zeros((h,), jnp.float32)
        gcn.append((w, b))
        _in = h
    params["gcn"] = gcn

    params["readout_w"], _ = linear(
        keys[-1], hidden_dims[-1], n_classes, with_bias=False
    )
    return params


# ---------------------------------------------------------------------------
# Forward (graph structure is densified on the host, all math in one kernel).
# ---------------------------------------------------------------------------
def _build_adj_pool(n_nodes, edge_index, batch, num_graphs):
    # Dense adjacency: A[dst, src] += 1  (sum aggregation, normalize=False,
    # no self loops).
    src, dst = edge_index[0], edge_index[1]
    adj = jnp.zeros((n_nodes, n_nodes), jnp.float32).at[dst, src].add(1.0)

    # Mean-pooling matrix P: (num_graphs, n_nodes).
    one_hot = (batch[None, :] == jnp.arange(num_graphs)[:, None]).astype(jnp.float32)
    counts = jnp.maximum(one_hot.sum(axis=1, keepdims=True), 1.0)
    pool = one_hot / counts
    return adj, pool


@functools.partial(jax.jit, static_argnames=("num_graphs",))
def gcnnet2_forward(params, x, edge_index, batch, num_graphs):
    n_nodes = x.shape[0]
    adj, pool = _build_adj_pool(n_nodes, edge_index, batch, num_graphs)

    inputs = [
        x.astype(jnp.float32),
        adj,
        pool,
        params["emb_w"].T.astype(jnp.float32),
        params["emb_b"].reshape(1, -1).astype(jnp.float32),
    ]
    for w, b in params["gcn"]:
        inputs.append(w.T.astype(jnp.float32))
        inputs.append(b.reshape(1, -1).astype(jnp.float32))
    inputs.append(params["readout_w"].T.astype(jnp.float32))

    n_layers = len(params["gcn"])
    n_classes = params["readout_w"].shape[0]

    # Single invocation (no grid): all operands (< 1 MiB total) live in VMEM
    # for the whole forward; only the (num_graphs, n_classes) logits go back
    # to HBM.  Work is far too small to benefit from a parallel grid axis
    # (v7x second TensorCore), so we keep one program.
    return pl.pallas_call(
        _make_fused_kernel(n_layers),
        out_shape=jax.ShapeDtypeStruct((num_graphs, n_classes), jnp.float32),
        in_specs=[pl.BlockSpec(memory_space=pltpu.MemorySpace.VMEM)] * len(inputs),
        out_specs=pl.BlockSpec(memory_space=pltpu.MemorySpace.VMEM),
    )(*inputs)


# Pure-JAX reference for correctness checking.
def _reference_forward(params, x, adj, pool):
    h = x @ params["emb_w"].T + params["emb_b"]
    for w, b in params["gcn"]:
        h = jnp.maximum(adj @ (h @ w.T) + b, 0.0)
    hg = pool @ h
    return hg @ params["readout_w"].T


# ---------------------------------------------------------------------------
if __name__ == "__main__":
    IN_DIM = 128
    HIDDEN_DIMS = [128, 128, 128, 128]
    N_CLASSES = 256
    NUM_GRAPHS = 2
    NODES_PER_GRAPH = 64
    N_NODES = NUM_GRAPHS * NODES_PER_GRAPH  # 128

    key = jax.random.PRNGKey(0)
    k_param, k_x = jax.random.split(key)

    params = init_params(k_param, IN_DIM, HIDDEN_DIMS, N_CLASSES)

    # Node features.
    x = jax.random.normal(k_x, (N_NODES, IN_DIM), jnp.float32)

    # Deterministic bidirectional ring graph within each of the two graphs.
    src_list, dst_list = [], []
    for g in range(NUM_GRAPHS):
        off = g * NODES_PER_GRAPH
        for i in range(NODES_PER_GRAPH):
            a = off + i
            b = off + (i + 1) % NODES_PER_GRAPH
            src_list += [a, b]
            dst_list += [b, a]
    edge_index = jnp.array([src_list, dst_list], dtype=jnp.int32)  # (2, E)

    # batch assignment: node -> graph id.
    batch = jnp.repeat(jnp.arange(NUM_GRAPHS, dtype=jnp.int32), NODES_PER_GRAPH)

    logits = gcnnet2_forward(params, x, edge_index, batch, NUM_GRAPHS)
    logits = jax.block_until_ready(logits)

    # Correctness checks against a plain-JAX reference.
    adj_ref, pool_ref = _build_adj_pool(N_NODES, edge_index, batch, NUM_GRAPHS)
    ref = _reference_forward(params, x, adj_ref, pool_ref)

    assert logits.shape == (NUM_GRAPHS, N_CLASSES)
    assert bool(jnp.all(jnp.isfinite(logits)))
    assert bool(jnp.allclose(logits, ref, rtol=2e-2, atol=2e-2))
    print("KERNEL_OK")
</pallas_src>

<mosaic_0001>
module attributes {stable_mosaic.version = 11 : i64} {
  func.func @kernel(%arg0: memref<128x128xf32, #tpu.memory_space<vmem>>, %arg1: memref<128x128xf32, #tpu.memory_space<vmem>>, %arg2: memref<2x128xf32, #tpu.memory_space<vmem>>, %arg3: memref<128x128xf32, #tpu.memory_space<vmem>>, %arg4: memref<1x128xf32, #tpu.memory_space<vmem>>, %arg5: memref<128x128xf32, #tpu.memory_space<vmem>>, %arg6: memref<1x128xf32, #tpu.memory_space<vmem>>, %arg7: memref<128x128xf32, #tpu.memory_space<vmem>>, %arg8: memref<1x128xf32, #tpu.memory_space<vmem>>, %arg9: memref<128x128xf32, #tpu.memory_space<vmem>>, %arg10: memref<1x128xf32, #tpu.memory_space<vmem>>, %arg11: memref<128x128xf32, #tpu.memory_space<vmem>>, %arg12: memref<1x128xf32, #tpu.memory_space<vmem>>, %arg13: memref<128x256xf32, #tpu.memory_space<vmem>>, %arg14: memref<2x256xf32, #tpu.memory_space<vmem>>) attributes {dimension_semantics = [], scalar_prefetch = 0 : i64, scratch_operands = 0 : i64, tpu.core_type = #tpu.core_type<tc>} {
    %c0 = arith.constant 0 : index
    %c0_0 = arith.constant 0 : index
    %0 = vector.load %arg1[%c0, %c0_0] : memref<128x128xf32, #tpu.memory_space<vmem>>, vector<128x128xf32>
    %c0_1 = arith.constant 0 : index
    %c0_2 = arith.constant 0 : index
    %1 = vector.load %arg0[%c0_1, %c0_2] : memref<128x128xf32, #tpu.memory_space<vmem>>, vector<128x128xf32>
    %c0_3 = arith.constant 0 : index
    %c0_4 = arith.constant 0 : index
    %2 = vector.load %arg3[%c0_3, %c0_4] : memref<128x128xf32, #tpu.memory_space<vmem>>, vector<128x128xf32>
    %cst = arith.constant dense<0.000000e+00> : vector<128x128xf32>
    %3 = tpu.matmul %1, %2, %cst {dimension_numbers = #tpu.dot_dimension_numbers<[1], [0], [0], [1], [0, 0, 1, 1], [], []>} : vector<128x128xf32>, vector<128x128xf32>, vector<128x128xf32> -> vector<128x128xf32>
    %c0_5 = arith.constant 0 : index
    %c0_6 = arith.constant 0 : index
    %4 = vector.load %arg4[%c0_5, %c0_6] : memref<1x128xf32, #tpu.memory_space<vmem>>, vector<1x128xf32>
    %5 = vector.broadcast %4 : vector<1x128xf32> to vector<128x128xf32>
    %6 = arith.addf %3, %5 : vector<128x128xf32>
    %c0_7 = arith.constant 0 : index
    %c0_8 = arith.constant 0 : index
    %7 = vector.load %arg5[%c0_7, %c0_8] : memref<128x128xf32, #tpu.memory_space<vmem>>, vector<128x128xf32>
    %c0_9 = arith.constant 0 : index
    %c0_10 = arith.constant 0 : index
    %8 = vector.load %arg6[%c0_9, %c0_10] : memref<1x128xf32, #tpu.memory_space<vmem>>, vector<1x128xf32>
    %cst_11 = arith.constant dense<0.000000e+00> : vector<128x128xf32>
    %9 = tpu.matmul %6, %7, %cst_11 {dimension_numbers = #tpu.dot_dimension_numbers<[1], [0], [0], [1], [0, 0, 1, 1], [], []>} : vector<128x128xf32>, vector<128x128xf32>, vector<128x128xf32> -> vector<128x128xf32>
    %cst_12 = arith.constant dense<0.000000e+00> : vector<128x128xf32>
    %10 = tpu.matmul %0, %9, %cst_12 {dimension_numbers = #tpu.dot_dimension_numbers<[1], [0], [0], [1], [0, 0, 1, 1], [], []>} : vector<128x128xf32>, vector<128x128xf32>, vector<128x128xf32> -> vector<128x128xf32>
    %11 = vector.broadcast %8 : vector<1x128xf32> to vector<128x128xf32>
    %12 = arith.addf %10, %11 : vector<128x128xf32>
    %cst_13 = arith.constant 0.000000e+00 : f32
    %13 = vector.broadcast %cst_13 : f32 to vector<128x128xf32>
    %14 = arith.maximumf %12, %13 : vector<128x128xf32>
    %c0_14 = arith.constant 0 : index
    %c0_15 = arith.constant 0 : index
    %15 = vector.load %arg7[%c0_14, %c0_15] : memref<128x128xf32, #tpu.memory_space<vmem>>, vector<128x128xf32>
    %c0_16 = arith.constant 0 : index
    %c0_17 = arith.constant 0 : index
    %16 = vector.load %arg8[%c0_16, %c0_17] : memref<1x128xf32, #tpu.memory_space<vmem>>, vector<1x128xf32>
    %cst_18 = arith.constant dense<0.000000e+00> : vector<128x128xf32>
    %17 = tpu.matmul %14, %15, %cst_18 {dimension_numbers = #tpu.dot_dimension_numbers<[1], [0], [0], [1], [0, 0, 1, 1], [], []>} : vector<128x128xf32>, vector<128x128xf32>, vector<128x128xf32> -> vector<128x128xf32>
    %cst_19 = arith.constant dense<0.000000e+00> : vector<128x128xf32>
    %18 = tpu.matmul %0, %17, %cst_19 {dimension_numbers = #tpu.dot_dimension_numbers<[1], [0], [0], [1], [0, 0, 1, 1], [], []>} : vector<128x128xf32>, vector<128x128xf32>, vector<128x128xf32> -> vector<128x128xf32>
    %19 = vector.broadcast %16 : vector<1x128xf32> to vector<128x128xf32>
    %20 = arith.addf %18, %19 : vector<128x128xf32>
    %cst_20 = arith.constant 0.000000e+00 : f32
    %21 = vector.broadcast %cst_20 : f32 to vector<128x128xf32>
    %22 = arith.maximumf %20, %21 : vector<128x128xf32>
    %c0_21 = arith.constant 0 : index
    %c0_22 = arith.constant 0 : index
    %23 = vector.load %arg9[%c0_21, %c0_22] : memref<128x128xf32, #tpu.memory_space<vmem>>, vector<128x128xf32>
    %c0_23 = arith.constant 0 : index
    %c0_24 = arith.constant 0 : index
    %24 = vector.load %arg10[%c0_23, %c0_24] : memref<1x128xf32, #tpu.memory_space<vmem>>, vector<1x128xf32>
    %cst_25 = arith.constant dense<0.000000e+00> : vector<128x128xf32>
    %25 = tpu.matmul %22, %23, %cst_25 {dimension_numbers = #tpu.dot_dimension_numbers<[1], [0], [0], [1], [0, 0, 1, 1], [], []>} : vector<128x128xf32>, vector<128x128xf32>, vector<128x128xf32> -> vector<128x128xf32>
    %cst_26 = arith.constant dense<0.000000e+00> : vector<128x128xf32>
    %26 = tpu.matmul %0, %25, %cst_26 {dimension_numbers = #tpu.dot_dimension_numbers<[1], [0], [0], [1], [0, 0, 1, 1], [], []>} : vector<128x128xf32>, vector<128x128xf32>, vector<128x128xf32> -> vector<128x128xf32>
    %27 = vector.broadcast %24 : vector<1x128xf32> to vector<128x128xf32>
    %28 = arith.addf %26, %27 : vector<128x128xf32>
    %cst_27 = arith.constant 0.000000e+00 : f32
    %29 = vector.broadcast %cst_27 : f32 to vector<128x128xf32>
    %30 = arith.maximumf %28, %29 : vector<128x128xf32>
    %c0_28 = arith.constant 0 : index
    %c0_29 = arith.constant 0 : index
    %31 = vector.load %arg11[%c0_28, %c0_29] : memref<128x128xf32, #tpu.memory_space<vmem>>, vector<128x128xf32>
    %c0_30 = arith.constant 0 : index
    %c0_31 = arith.constant 0 : index
    %32 = vector.load %arg12[%c0_30, %c0_31] : memref<1x128xf32, #tpu.memory_space<vmem>>, vector<1x128xf32>
    %cst_32 = arith.constant dense<0.000000e+00> : vector<128x128xf32>
    %33 = tpu.matmul %30, %31, %cst_32 {dimension_numbers = #tpu.dot_dimension_numbers<[1], [0], [0], [1], [0, 0, 1, 1], [], []>} : vector<128x128xf32>, vector<128x128xf32>, vector<128x128xf32> -> vector<128x128xf32>
    %cst_33 = arith.constant dense<0.000000e+00> : vector<128x128xf32>
    %34 = tpu.matmul %0, %33, %cst_33 {dimension_numbers = #tpu.dot_dimension_numbers<[1], [0], [0], [1], [0, 0, 1, 1], [], []>} : vector<128x128xf32>, vector<128x128xf32>, vector<128x128xf32> -> vector<128x128xf32>
    %35 = vector.broadcast %32 : vector<1x128xf32> to vector<128x128xf32>
    %36 = arith.addf %34, %35 : vector<128x128xf32>
    %cst_34 = arith.constant 0.000000e+00 : f32
    %37 = vector.broadcast %cst_34 : f32 to vector<128x128xf32>
    %38 = arith.maximumf %36, %37 : vector<128x128xf32>
    %c0_35 = arith.constant 0 : index
    %c0_36 = arith.constant 0 : index
    %39 = vector.load %arg2[%c0_35, %c0_36] : memref<2x128xf32, #tpu.memory_space<vmem>>, vector<2x128xf32>
    %cst_37 = arith.constant dense<0.000000e+00> : vector<2x128xf32>
    %40 = tpu.matmul %39, %38, %cst_37 {dimension_numbers = #tpu.dot_dimension_numbers<[1], [0], [0], [1], [0, 0, 1, 1], [], []>} : vector<2x128xf32>, vector<128x128xf32>, vector<2x128xf32> -> vector<2x128xf32>
    %c0_38 = arith.constant 0 : index
    %c0_39 = arith.constant 0 : index
    %41 = vector.load %arg13[%c0_38, %c0_39] : memref<128x256xf32, #tpu.memory_space<vmem>>, vector<128x256xf32>
    %cst_40 = arith.constant dense<0.000000e+00> : vector<2x256xf32>
    %42 = tpu.matmul %40, %41, %cst_40 {dimension_numbers = #tpu.dot_dimension_numbers<[1], [0], [0], [1], [0, 0, 1, 1], [], []>} : vector<2x128xf32>, vector<128x256xf32>, vector<2x256xf32> -> vector<2x256xf32>
    %c0_41 = arith.constant 0 : index
    %c0_42 = arith.constant 0 : index
    %43 = vector.load %arg14[%c0_41, %c0_42] : memref<2x256xf32, #tpu.memory_space<vmem>>, vector<2x256xf32>
    tpu.vector_store %arg14[%c0_41, %c0_42], %42 {strides = array<i32>} : memref<2x256xf32, #tpu.memory_space<vmem>>, vector<2x256xf32>,
    return
  }
}

</mosaic_0001>

<llo_original>
// kernel: gcnnet2_forward.1
$region0: #{gcnnet2_forward.1}
  #allocation0 [shape = 'u32[]', space=smem, size = 0x4, offset = 0x4, fixed_abs, tag = 'smem constant byte address 0x4 - core index']
  #allocation1 [shape = 'u32[72,128]{1,0:T(1,128)}', space=vmem, size = 0x9000, scoped, tag = 'internal scratch']
  %s0 = inlined_call_operand.vmem [shape: f32[128,128], index: 0, kind: input, shape index: {}]
  %s1 = inlined_call_operand.vmem [shape: f32[128,128], index: 1, kind: input, shape index: {}]
  %s2 = inlined_call_operand.vmem [shape: f32[2,128], index: 2, kind: input, shape index: {}]
  %s3 = inlined_call_operand.vmem [shape: f32[128,128], index: 3, kind: input, shape index: {}]
  %s4 = inlined_call_operand.vmem [shape: f32[1,128], index: 4, kind: input, shape index: {}]
  %s5 = inlined_call_operand.vmem [shape: f32[128,128], index: 5, kind: input, shape index: {}]
  %s6 = inlined_call_operand.vmem [shape: f32[1,128], index: 6, kind: input, shape index: {}]
  %s7 = inlined_call_operand.vmem [shape: f32[128,128], index: 7, kind: input, shape index: {}]
  %s8 = inlined_call_operand.vmem [shape: f32[1,128], index: 8, kind: input, shape index: {}]
  %s9 = inlined_call_operand.vmem [shape: f32[128,128], index: 9, kind: input, shape index: {}]
  %s10 = inlined_call_operand.vmem [shape: f32[1,128], index: 10, kind: input, shape index: {}]
  %s11 = inlined_call_operand.vmem [shape: f32[128,128], index: 11, kind: input, shape index: {}]
  %s12 = inlined_call_operand.vmem [shape: f32[1,128], index: 12, kind: input, shape index: {}]
  %s13 = inlined_call_operand.vmem [shape: f32[128,256], index: 13, kind: input, shape index: {}]
  %s14 = inlined_call_operand.hbm [shape: f32[2,256], index: 14, kind: output, shape index: {}]
  %s15 = sld [smem:[#allocation0]]
  $region66: #{gcnnet2_forward.1} parent=0
    _
  %s17 = ssub.s32 1, %s15
  %s18 = scalar_select 0, %s17, %s15
  $region1: #{gcnnet2_forward.1} parent=0
    #allocation2 [shape = 'u8[2048]{0}', space=vmem, size = 0x800, scoped, tag = 'output window, operand 0, single buffered']
    #allocation3 [shape = 's32[1]{0}', space=sflag, size = 0x4, scoped, tag = 'scoped memory for gcnnet2_forward.1']
    %19 = vsyncpa [#allocation3], 0
    // Predicated region
    $region2: #{gcnnet2_forward.1} parent=1 // pred_check
      _
    $region3: #{gcnnet2_forward.1} parent=1 // pred_check_branch
      %21 = sbr.rel (0) target = $region5
    $region4: #{gcnnet2_forward.1} parent=1 // pred_region
      _
    $region5: #{gcnnet2_forward.1} parent=1 // pred_fallthru
      _
    // Predicated region
    $region6: #{gcnnet2_forward.1} parent=1 // pred_check
      _
    $region7: #{gcnnet2_forward.1} parent=1 // pred_check_branch
      %23 = sbr.rel (0) target = $region9
    $region8: #{gcnnet2_forward.1} parent=1 // pred_region
      _
    $region9: #{gcnnet2_forward.1} parent=1 // pred_fallthru
      _
    // Predicated region
    $region10: #{gcnnet2_forward.1} parent=1 // pred_check
      _
    $region11: #{gcnnet2_forward.1} parent=1 // pred_check_branch
      %25 = sbr.rel (0) target = $region13
    $region12: #{gcnnet2_forward.1} parent=1 // pred_region
      _
    $region13: #{gcnnet2_forward.1} parent=1 // pred_fallthru
      _
    // Predicated region
    $region14: #{gcnnet2_forward.1} parent=1 // pred_check
      _
    $region15: #{gcnnet2_forward.1} parent=1 // pred_check_branch
      %27 = sbr.rel (0) target = $region17
    $region16: #{gcnnet2_forward.1} parent=1 // pred_region
      _
    $region17: #{gcnnet2_forward.1} parent=1 // pred_fallthru
      _
    // Predicated region
    $region18: #{gcnnet2_forward.1} parent=1 // pred_check
      _
    $region19: #{gcnnet2_forward.1} parent=1 // pred_check_branch
      %29 = sbr.rel (0) target = $region21
    $region20: #{gcnnet2_forward.1} parent=1 // pred_region
      _
    $region21: #{gcnnet2_forward.1} parent=1 // pred_fallthru
      _
    // Predicated region
    $region22: #{gcnnet2_forward.1} parent=1 // pred_check
      _
    $region23: #{gcnnet2_forward.1} parent=1 // pred_check_branch
      %31 = sbr.rel (0) target = $region25
    $region24: #{gcnnet2_forward.1} parent=1 // pred_region
      _
    $region25: #{gcnnet2_forward.1} parent=1 // pred_fallthru
      _
    // Predicated region
    $region26: #{gcnnet2_forward.1} parent=1 // pred_check
      _
    $region27: #{gcnnet2_forward.1} parent=1 // pred_check_branch
      %33 = sbr.rel (0) target = $region29
    $region28: #{gcnnet2_forward.1} parent=1 // pred_region
      _
    $region29: #{gcnnet2_forward.1} parent=1 // pred_fallthru
      _
    // Predicated region
    $region30: #{gcnnet2_forward.1} parent=1 // pred_check
      _
    $region31: #{gcnnet2_forward.1} parent=1 // pred_check_branch
      %35 = sbr.rel (0) target = $region33
    $region32: #{gcnnet2_forward.1} parent=1 // pred_region
      _
    $region33: #{gcnnet2_forward.1} parent=1 // pred_fallthru
      _
    // Predicated region
    $region34: #{gcnnet2_forward.1} parent=1 // pred_check
      _
    $region35: #{gcnnet2_forward.1} parent=1 // pred_check_branch
      %37 = sbr.rel (0) target = $region37
    $region36: #{gcnnet2_forward.1} parent=1 // pred_region
      _
    $region37: #{gcnnet2_forward.1} parent=1 // pred_fallthru
      _
    // Predicated region
    $region38: #{gcnnet2_forward.1} parent=1 // pred_check
      _
    $region39: #{gcnnet2_forward.1} parent=1 // pred_check_branch
      %39 = sbr.rel (0) target = $region41
    $region40: #{gcnnet2_forward.1} parent=1 // pred_region
      _
    $region41: #{gcnnet2_forward.1} parent=1 // pred_fallthru
      _
    // Predicated region
    $region42: #{gcnnet2_forward.1} parent=1 // pred_check
      _
    $region43: #{gcnnet2_forward.1} parent=1 // pred_check_branch
      %41 = sbr.rel (0) target = $region45
    $region44: #{gcnnet2_forward.1} parent=1 // pred_region
      _
    $region45: #{gcnnet2_forward.1} parent=1 // pred_fallthru
      _
    // Predicated region
    $region46: #{gcnnet2_forward.1} parent=1 // pred_check
      _
    $region47: #{gcnnet2_forward.1} parent=1 // pred_check_branch
      %43 = sbr.rel (0) target = $region49
    $region48: #{gcnnet2_forward.1} parent=1 // pred_region
      _
    $region49: #{gcnnet2_forward.1} parent=1 // pred_fallthru
      _
    // Predicated region
    $region50: #{gcnnet2_forward.1} parent=1 // pred_check
      _
    $region51: #{gcnnet2_forward.1} parent=1 // pred_check_branch
      %45 = sbr.rel (0) target = $region53
    $region52: #{gcnnet2_forward.1} parent=1 // pred_region
      _
    $region53: #{gcnnet2_forward.1} parent=1 // pred_fallthru
      _
    // Predicated region
    $region54: #{gcnnet2_forward.1} parent=1 // pred_check
      _
    $region55: #{gcnnet2_forward.1} parent=1 // pred_check_branch
      %47 = sbr.rel (0) target = $region57
    $region56: #{gcnnet2_forward.1} parent=1 // pred_region
      _
    $region57: #{gcnnet2_forward.1} parent=1 // pred_fallthru
      _
    %v48 = vld [vmem:[%s1] sm:$0xff]
    %v49 = vld [vmem:[%s1 + $0x8] sm:$0xff]
    %v50 = vld [vmem:[%s1 + $0x10] sm:$0xff]
    %v51 = vld [vmem:[%s1 + $0x18] sm:$0xff]
    %v52 = vld [vmem:[%s1 + $0x20] sm:$0xff]
    %v53 = vld [vmem:[%s1 + $0x28] sm:$0xff]
    %v54 = vld [vmem:[%s1 + $0x30] sm:$0xff]
    %v55 = vld [vmem:[%s1 + $0x38] sm:$0xff]
    %v56 = vld [vmem:[%s1 + $0x40] sm:$0xff]
    %v57 = vld [vmem:[%s1 + $0x48] sm:$0xff]
    %v58 = vld [vmem:[%s1 + $0x50] sm:$0xff]
    %v59 = vld [vmem:[%s1 + $0x58] sm:$0xff]
    %v60 = vld [vmem:[%s1 + $0x60] sm:$0xff]
    %v61 = vld [vmem:[%s1 + $0x68] sm:$0xff]
    %v62 = vld [vmem:[%s1 + $0x70] sm:$0xff]
    %v63 = vld [vmem:[%s1 + $0x78] sm:$0xff]
    %v64 = vld [vmem:[%s0] sm:$0xff]
    %v65 = vld [vmem:[%s0 + $0x8] sm:$0xff]
    %v66 = vld [vmem:[%s0 + $0x10] sm:$0xff]
    %v67 = vld [vmem:[%s0 + $0x18] sm:$0xff]
    %v68 = vld [vmem:[%s0 + $0x20] sm:$0xff]
    %v69 = vld [vmem:[%s0 + $0x28] sm:$0xff]
    %v70 = vld [vmem:[%s0 + $0x30] sm:$0xff]
    %v71 = vld [vmem:[%s0 + $0x38] sm:$0xff]
    %v72 = vld [vmem:[%s0 + $0x40] sm:$0xff]
    %v73 = vld [vmem:[%s0 + $0x48] sm:$0xff]
    %v74 = vld [vmem:[%s0 + $0x50] sm:$0xff]
    %v75 = vld [vmem:[%s0 + $0x58] sm:$0xff]
    %v76 = vld [vmem:[%s0 + $0x60] sm:$0xff]
    %v77 = vld [vmem:[%s0 + $0x68] sm:$0xff]
    %v78 = vld [vmem:[%s0 + $0x70] sm:$0xff]
    %v79 = vld [vmem:[%s0 + $0x78] sm:$0xff]
    %v80 = vld [vmem:[%s3] sm:$0xff]
    %v81 = vld [vmem:[%s3 + $0x8] sm:$0xff]
    %v82 = vld [vmem:[%s3 + $0x10] sm:$0xff]
    %v83 = vld [vmem:[%s3 + $0x18] sm:$0xff]
    %v84 = vld [vmem:[%s3 + $0x20] sm:$0xff]
    %v85 = vld [vmem:[%s3 + $0x28] sm:$0xff]
    %v86 = vld [vmem:[%s3 + $0x30] sm:$0xff]
    %v87 = vld [vmem:[%s3 + $0x38] sm:$0xff]
    %v88 = vld [vmem:[%s3 + $0x40] sm:$0xff]
    %v89 = vld [vmem:[%s3 + $0x48] sm:$0xff]
    %v90 = vld [vmem:[%s3 + $0x50] sm:$0xff]
    %v91 = vld [vmem:[%s3 + $0x58] sm:$0xff]
    %v92 = vld [vmem:[%s3 + $0x60] sm:$0xff]
    %v93 = vld [vmem:[%s3 + $0x68] sm:$0xff]
    %v94 = vld [vmem:[%s3 + $0x70] sm:$0xff]
    %v95 = vld [vmem:[%s3 + $0x78] sm:$0xff]
    %v96 = vld [vmem:[%s4] sm:$0x1]
    %v98 = vperm.slane %v96, 0
    %100 = vmatpush.msra.mxu0 %v95
    %101 = vmatpush.msra.mxu0 %v94
    %102 = vmatpush.msra.mxu0 %v93
    %103 = vmatpush.msra.mxu0 %v92
    %104 = vmatpush.msra.mxu0 %v91
    %105 = vmatpush.msra.mxu0 %v90
    %106 = vmatpush.msra.mxu0 %v89
    %107 = vmatpush.msra.mxu0 %v88
    %108 = vmatpush.msra.mxu0 %v87
    %109 = vmatpush.msra.mxu0 %v86
    %110 = vmatpush.msra.mxu0 %v85
    %111 = vmatpush.msra.mxu0 %v84
    %112 = vmatpush.msra.mxu0 %v83
    %113 = vmatpush.msra.mxu0 %v82
    %114 = vmatpush.msra.mxu0 %v81
    %115 = vmatpush.msra.mxu0 %v80
    %116 = vmatmul.f32.gmra.mxu0 %v64
    %v117 = vpop.f32.mrf.mxu0
    %v118 = vadd.f32 %v98, %v117
    %119 = vmatmul.f32.gmra.mxu0 %v65
    %v120 = vpop.f32.mrf.mxu0
    %v121 = vadd.f32 %v98, %v120
    %122 = vmatmul.f32.gmra.mxu0 %v66
    %v123 = vpop.f32.mrf.mxu0
    %v124 = vadd.f32 %v98, %v123
    %125 = vmatmul.f32.gmra.mxu0 %v67
    %v126 = vpop.f32.mrf.mxu0
    %v127 = vadd.f32 %v98, %v126
    %128 = vmatmul.f32.gmra.mxu0 %v68
    %v129 = vpop.f32.mrf.mxu0
    %v130 = vadd.f32 %v98, %v129
    %131 = vmatmul.f32.gmra.mxu0 %v69
    %v132 = vpop.f32.mrf.mxu0
    %v133 = vadd.f32 %v98, %v132
    %134 = vmatmul.f32.gmra.mxu0 %v70
    %v135 = vpop.f32.mrf.mxu0
    %v136 = vadd.f32 %v98, %v135
    %137 = vmatmul.f32.gmra.mxu0 %v71
    %v138 = vpop.f32.mrf.mxu0
    %v139 = vadd.f32 %v98, %v138
    %140 = vmatmul.f32.gmra.mxu0 %v72
    %v141 = vpop.f32.mrf.mxu0
    %v142 = vadd.f32 %v98, %v141
    %143 = vmatmul.f32.gmra.mxu0 %v73
    %v144 = vpop.f32.mrf.mxu0
    %v145 = vadd.f32 %v98, %v144
    %146 = vmatmul.f32.gmra.mxu0 %v74
    %v147 = vpop.f32.mrf.mxu0
    %v148 = vadd.f32 %v98, %v147
    %149 = vmatmul.f32.gmra.mxu0 %v75
    %v150 = vpop.f32.mrf.mxu0
    %v151 = vadd.f32 %v98, %v150
    %152 = vmatmul.f32.gmra.mxu0 %v76
    %v153 = vpop.f32.mrf.mxu0
    %v154 = vadd.f32 %v98, %v153
    %155 = vmatmul.f32.gmra.mxu0 %v77
    %v156 = vpop.f32.mrf.mxu0
    %v157 = vadd.f32 %v98, %v156
    %158 = vmatmul.f32.gmra.mxu0 %v78
    %v159 = vpop.f32.mrf.mxu0
    %v160 = vadd.f32 %v98, %v159
    %161 = vmatmul.f32.gmra.mxu0 %v79
    %v162 = vpop.f32.mrf.mxu0
    %v163 = vadd.f32 %v98, %v162
    %164 = vdwg.mxu0
    %v165 = vld [vmem:[%s5] sm:$0xff]
    %v166 = vld [vmem:[%s5 + $0x8] sm:$0xff]
    %v167 = vld [vmem:[%s5 + $0x10] sm:$0xff]
    %v168 = vld [vmem:[%s5 + $0x18] sm:$0xff]
    %v169 = vld [vmem:[%s5 + $0x20] sm:$0xff]
    %v170 = vld [vmem:[%s5 + $0x28] sm:$0xff]
    %v171 = vld [vmem:[%s5 + $0x30] sm:$0xff]
    %v172 = vld [vmem:[%s5 + $0x38] sm:$0xff]
    %v173 = vld [vmem:[%s5 + $0x40] sm:$0xff]
    %v174 = vld [vmem:[%s5 + $0x48] sm:$0xff]
    %v175 = vld [vmem:[%s5 + $0x50] sm:$0xff]
    %v176 = vld [vmem:[%s5 + $0x58] sm:$0xff]
    %v177 = vld [vmem:[%s5 + $0x60] sm:$0xff]
    %v178 = vld [vmem:[%s5 + $0x68] sm:$0xff]
    %v179 = vld [vmem:[%s5 + $0x70] sm:$0xff]
    %v180 = vld [vmem:[%s5 + $0x78] sm:$0xff]
    %v181 = vld [vmem:[%s6] sm:$0x1]
    %182 = vmatpush.msra.mxu0 %v180
    %183 = vmatpush.msra.mxu0 %v179
    %184 = vmatpush.msra.mxu0 %v178
    %185 = vmatpush.msra.mxu0 %v177
    %186 = vmatpush.msra.mxu0 %v176
    %187 = vmatpush.msra.mxu0 %v175
    %188 = vmatpush.msra.mxu0 %v174
    %189 = vmatpush.msra.mxu0 %v173
    %190 = vmatpush.msra.mxu0 %v172
    %191 = vmatpush.msra.mxu0 %v171
    %192 = vmatpush.msra.mxu0 %v170
    %193 = vmatpush.msra.mxu0 %v169
    %194 = vmatpush.msra.mxu0 %v168
    %195 = vmatpush.msra.mxu0 %v167
    %196 = vmatpush.msra.mxu0 %v166
    %197 = vmatpush.msra.mxu0 %v165
    %198 = vmatmul.f32.gmra.mxu0 %v118
    %v199 = vpop.f32.mrf.mxu0
    %v200 = vadd.f32 0.0, %v199
    %201 = vmatmul.f32.gmra.mxu0 %v121
    %v202 = vpop.f32.mrf.mxu0
    %v203 = vadd.f32 0.0, %v202
    %204 = vmatmul.f32.gmra.mxu0 %v124
    %v205 = vpop.f32.mrf.mxu0
    %v206 = vadd.f32 0.0, %v205
    %207 = vmatmul.f32.gmra.mxu0 %v127
    %v208 = vpop.f32.mrf.mxu0
    %v209 = vadd.f32 0.0, %v208
    %210 = vmatmul.f32.gmra.mxu0 %v130
    %v211 = vpop.f32.mrf.mxu0
    %v212 = vadd.f32 0.0, %v211
    %213 = vmatmul.f32.gmra.mxu0 %v133
    %v214 = vpop.f32.mrf.mxu0
    %v215 = vadd.f32 0.0, %v214
    %216 = vmatmul.f32.gmra.mxu0 %v136
    %v217 = vpop.f32.mrf.mxu0
    %v218 = vadd.f32 0.0, %v217
    %219 = vmatmul.f32.gmra.mxu0 %v139
    %v220 = vpop.f32.mrf.mxu0
    %v221 = vadd.f32 0.0, %v220
    %222 = vmatmul.f32.gmra.mxu0 %v142
    %v223 = vpop.f32.mrf.mxu0
    %v224 = vadd.f32 0.0, %v223
    %225 = vmatmul.f32.gmra.mxu0 %v145
    %v226 = vpop.f32.mrf.mxu0
    %v227 = vadd.f32 0.0, %v226
    %228 = vmatmul.f32.gmra.mxu0 %v148
    %v229 = vpop.f32.mrf.mxu0
    %v230 = vadd.f32 0.0, %v229
    %231 = vmatmul.f32.gmra.mxu0 %v151
    %v232 = vpop.f32.mrf.mxu0
    %v233 = vadd.f32 0.0, %v232
    %234 = vmatmul.f32.gmra.mxu0 %v154
    %v235 = vpop.f32.mrf.mxu0
    %v236 = vadd.f32 0.0, %v235
    %237 = vmatmul.f32.gmra.mxu0 %v157
    %v238 = vpop.f32.mrf.mxu0
    %v239 = vadd.f32 0.0, %v238
    %240 = vmatmul.f32.gmra.mxu0 %v160
    %v241 = vpop.f32.mrf.mxu0
    %v242 = vadd.f32 0.0, %v241
    %243 = vmatmul.f32.gmra.mxu0 %v163
    %v244 = vpop.f32.mrf.mxu0
    %v245 = vadd.f32 0.0, %v244
    %246 = vdwg.mxu0
    %v248 = vperm.slane %v181, 0
    %250 = vmatpush.msra.mxu0 %v245
    %251 = vmatpush.msra.mxu0 %v242
    %252 = vmatpush.msra.mxu0 %v239
    %253 = vmatpush.msra.mxu0 %v236
    %254 = vmatpush.msra.mxu0 %v233
    %255 = vmatpush.msra.mxu0 %v230
    %256 = vmatpush.msra.mxu0 %v227
    %257 = vmatpush.msra.mxu0 %v224
    %258 = vmatpush.msra.mxu0 %v221
    %259 = vmatpush.msra.mxu0 %v218
    %260 = vmatpush.msra.mxu0 %v215
    %261 = vmatpush.msra.mxu0 %v212
    %262 = vmatpush.msra.mxu0 %v209
    %263 = vmatpush.msra.mxu0 %v206
    %264 = vmatpush.msra.mxu0 %v203
    %265 = vmatpush.msra.mxu0 %v200
    %266 = vmatmul.f32.gmra.mxu0 %v48
    %v267 = vpop.f32.mrf.mxu0
    %v268 = vadd.f32 %v248, %v267
    %269 = vmatmul.f32.gmra.mxu0 %v49
    %v270 = vpop.f32.mrf.mxu0
    %v271 = vadd.f32 %v248, %v270
    %272 = vmatmul.f32.gmra.mxu0 %v50
    %v273 = vpop.f32.mrf.mxu0
    %v274 = vadd.f32 %v248, %v273
    %275 = vmatmul.f32.gmra.mxu0 %v51
    %v276 = vpop.f32.mrf.mxu0
    %v277 = vadd.f32 %v248, %v276
    %278 = vmatmul.f32.gmra.mxu0 %v52
    %v279 = vpop.f32.mrf.mxu0
    %v280 = vadd.f32 %v248, %v279
    %281 = vmatmul.f32.gmra.mxu0 %v53
    %v282 = vpop.f32.mrf.mxu0
    %v283 = vadd.f32 %v248, %v282
    %284 = vmatmul.f32.gmra.mxu0 %v54
    %v285 = vpop.f32.mrf.mxu0
    %v286 = vadd.f32 %v248, %v285
    %287 = vmatmul.f32.gmra.mxu0 %v55
    %v288 = vpop.f32.mrf.mxu0
    %v289 = vadd.f32 %v248, %v288
    %290 = vmatmul.f32.gmra.mxu0 %v56
    %v291 = vpop.f32.mrf.mxu0
    %v292 = vadd.f32 %v248, %v291
    %293 = vmatmul.f32.gmra.mxu0 %v57
    %v294 = vpop.f32.mrf.mxu0
    %v295 = vadd.f32 %v248, %v294
    %296 = vmatmul.f32.gmra.mxu0 %v58
    %v297 = vpop.f32.mrf.mxu0
    %v298 = vadd.f32 %v248, %v297
    %299 = vmatmul.f32.gmra.mxu0 %v59
    %v300 = vpop.f32.mrf.mxu0
    %v301 = vadd.f32 %v248, %v300
    %302 = vmatmul.f32.gmra.mxu0 %v60
    %v303 = vpop.f32.mrf.mxu0
    %v304 = vadd.f32 %v248, %v303
    %305 = vmatmul.f32.gmra.mxu0 %v61
    %v306 = vpop.f32.mrf.mxu0
    %v307 = vadd.f32 %v248, %v306
    %308 = vmatmul.f32.gmra.mxu0 %v62
    %v309 = vpop.f32.mrf.mxu0
    %v310 = vadd.f32 %v248, %v309
    %311 = vmatmul.f32.gmra.mxu0 %v63
    %v312 = vpop.f32.mrf.mxu0
    %v313 = vadd.f32 %v248, %v312
    %314 = vdwg.mxu0
    %v315 = vmax.f32 %v268, 0.0
    %v316 = vmax.f32 %v271, 0.0
    %v317 = vmax.f32 %v274, 0.0
    %v318 = vmax.f32 %v277, 0.0
    %v319 = vmax.f32 %v280, 0.0
    %v320 = vmax.f32 %v283, 0.0
    %v321 = vmax.f32 %v286, 0.0
    %v322 = vmax.f32 %v289, 0.0
    %v323 = vmax.f32 %v292, 0.0
    %v324 = vmax.f32 %v295, 0.0
    %v325 = vmax.f32 %v298, 0.0
    %v326 = vmax.f32 %v301, 0.0
    %v327 = vmax.f32 %v304, 0.0
    %v328 = vmax.f32 %v307, 0.0
    %v329 = vmax.f32 %v310, 0.0
    %v330 = vmax.f32 %v313, 0.0
    %v331 = vld [vmem:[%s7] sm:$0xff]
    %v332 = vld [vmem:[%s7 + $0x8] sm:$0xff]
    %v333 = vld [vmem:[%s7 + $0x10] sm:$0xff]
    %v334 = vld [vmem:[%s7 + $0x18] sm:$0xff]
    %v335 = vld [vmem:[%s7 + $0x20] sm:$0xff]
    %v336 = vld [vmem:[%s7 + $0x28] sm:$0xff]
    %v337 = vld [vmem:[%s7 + $0x30] sm:$0xff]
    %v338 = vld [vmem:[%s7 + $0x38] sm:$0xff]
    %v339 = vld [vmem:[%s7 + $0x40] sm:$0xff]
    %v340 = vld [vmem:[%s7 + $0x48] sm:$0xff]
    %v341 = vld [vmem:[%s7 + $0x50] sm:$0xff]
    %v342 = vld [vmem:[%s7 + $0x58] sm:$0xff]
    %v343 = vld [vmem:[%s7 + $0x60] sm:$0xff]
    %v344 = vld [vmem:[%s7 + $0x68] sm:$0xff]
    %v345 = vld [vmem:[%s7 + $0x70] sm:$0xff]
    %v346 = vld [vmem:[%s7 + $0x78] sm:$0xff]
    %v347 = vld [vmem:[%s8] sm:$0x1]
    %348 = vmatpush.msra.mxu0 %v346
    %349 = vmatpush.msra.mxu0 %v345
    %350 = vmatpush.msra.mxu0 %v344
    %351 = vmatpush.msra.mxu0 %v343
    %352 = vmatpush.msra.mxu0 %v342
    %353 = vmatpush.msra.mxu0 %v341
    %354 = vmatpush.msra.mxu0 %v340
    %355 = vmatpush.msra.mxu0 %v339
    %356 = vmatpush.msra.mxu0 %v338
    %357 = vmatpush.msra.mxu0 %v337
    %358 = vmatpush.msra.mxu0 %v336
    %359 = vmatpush.msra.mxu0 %v335
    %360 = vmatpush.msra.mxu0 %v334
    %361 = vmatpush.msra.mxu0 %v333
    %362 = vmatpush.msra.mxu0 %v332
    %363 = vmatpush.msra.mxu0 %v331
    %364 = vmatmul.f32.gmra.mxu0 %v315
    %v365 = vpop.f32.mrf.mxu0
    %v366 = vadd.f32 0.0, %v365
    %367 = vmatmul.f32.gmra.mxu0 %v316
    %v368 = vpop.f32.mrf.mxu0
    %v369 = vadd.f32 0.0, %v368
    %370 = vmatmul.f32.gmra.mxu0 %v317
    %v371 = vpop.f32.mrf.mxu0
    %v372 = vadd.f32 0.0, %v371
    %373 = vmatmul.f32.gmra.mxu0 %v318
    %v374 = vpop.f32.mrf.mxu0
    %v375 = vadd.f32 0.0, %v374
    %376 = vmatmul.f32.gmra.mxu0 %v319
    %v377 = vpop.f32.mrf.mxu0
    %v378 = vadd.f32 0.0, %v377
    %379 = vmatmul.f32.gmra.mxu0 %v320
    %v380 = vpop.f32.mrf.mxu0
    %v381 = vadd.f32 0.0, %v380
    %382 = vmatmul.f32.gmra.mxu0 %v321
    %v383 = vpop.f32.mrf.mxu0
    %v384 = vadd.f32 0.0, %v383
    %385 = vmatmul.f32.gmra.mxu0 %v322
    %v386 = vpop.f32.mrf.mxu0
    %v387 = vadd.f32 0.0, %v386
    %388 = vmatmul.f32.gmra.mxu0 %v323
    %v389 = vpop.f32.mrf.mxu0
    %v390 = vadd.f32 0.0, %v389
    %391 = vmatmul.f32.gmra.mxu0 %v324
    %v392 = vpop.f32.mrf.mxu0
    %v393 = vadd.f32 0.0, %v392
    %394 = vmatmul.f32.gmra.mxu0 %v325
    %v395 = vpop.f32.mrf.mxu0
    %v396 = vadd.f32 0.0, %v395
    %397 = vmatmul.f32.gmra.mxu0 %v326
    %v398 = vpop.f32.mrf.mxu0
    %v399 = vadd.f32 0.0, %v398
    %400 = vmatmul.f32.gmra.mxu0 %v327
    %v401 = vpop.f32.mrf.mxu0
    %v402 = vadd.f32 0.0, %v401
    %403 = vmatmul.f32.gmra.mxu0 %v328
    %v404 = vpop.f32.mrf.mxu0
    %v405 = vadd.f32 0.0, %v404
    %406 = vmatmul.f32.gmra.mxu0 %v329
    %v407 = vpop.f32.mrf.mxu0
    %v408 = vadd.f32 0.0, %v407
    %409 = vmatmul.f32.gmra.mxu0 %v330
    %v410 = vpop.f32.mrf.mxu0
    %v411 = vadd.f32 0.0, %v410
    %412 = vdwg.mxu0
    %v414 = vperm.slane %v347, 0
    %416 = vmatpush.msra.mxu0 %v411
    %417 = vmatpush.msra.mxu0 %v408
    %418 = vmatpush.msra.mxu0 %v405
    %419 = vmatpush.msra.mxu0 %v402
    %420 = vmatpush.msra.mxu0 %v399
    %421 = vmatpush.msra.mxu0 %v396
    %422 = vmatpush.msra.mxu0 %v393
    %423 = vmatpush.msra.mxu0 %v390
    %424 = vmatpush.msra.mxu0 %v387
    %425 = vmatpush.msra.mxu0 %v384
    %426 = vmatpush.msra.mxu0 %v381
    %427 = vmatpush.msra.mxu0 %v378
    %428 = vmatpush.msra.mxu0 %v375
    %429 = vmatpush.msra.mxu0 %v372
    %430 = vmatpush.msra.mxu0 %v369
    %431 = vmatpush.msra.mxu0 %v366
    %432 = vmatmul.f32.gmra.mxu0 %v48
    %v433 = vpop.f32.mrf.mxu0
    %v434 = vadd.f32 %v414, %v433
    %435 = vmatmul.f32.gmra.mxu0 %v49
    %v436 = vpop.f32.mrf.mxu0
    %v437 = vadd.f32 %v414, %v436
    %438 = vmatmul.f32.gmra.mxu0 %v50
    %v439 = vpop.f32.mrf.mxu0
    %v440 = vadd.f32 %v414, %v439
    %441 = vmatmul.f32.gmra.mxu0 %v51
    %v442 = vpop.f32.mrf.mxu0
    %v443 = vadd.f32 %v414, %v442
    %444 = vmatmul.f32.gmra.mxu0 %v52
    %v445 = vpop.f32.mrf.mxu0
    %v446 = vadd.f32 %v414, %v445
    %447 = vmatmul.f32.gmra.mxu0 %v53
    %v448 = vpop.f32.mrf.mxu0
    %v449 = vadd.f32 %v414, %v448
    %450 = vmatmul.f32.gmra.mxu0 %v54
    %v451 = vpop.f32.mrf.mxu0
    %v452 = vadd.f32 %v414, %v451
    %453 = vmatmul.f32.gmra.mxu0 %v55
    %v454 = vpop.f32.mrf.mxu0
    %v455 = vadd.f32 %v414, %v454
    %456 = vmatmul.f32.gmra.mxu0 %v56
    %v457 = vpop.f32.mrf.mxu0
    %v458 = vadd.f32 %v414, %v457
    %459 = vmatmul.f32.gmra.mxu0 %v57
    %v460 = vpop.f32.mrf.mxu0
    %v461 = vadd.f32 %v414, %v460
    %462 = vmatmul.f32.gmra.mxu0 %v58
    %v463 = vpop.f32.mrf.mxu0
    %v464 = vadd.f32 %v414, %v463
    %465 = vmatmul.f32.gmra.mxu0 %v59
    %v466 = vpop.f32.mrf.mxu0
    %v467 = vadd.f32 %v414, %v466
    %468 = vmatmul.f32.gmra.mxu0 %v60
    %v469 = vpop.f32.mrf.mxu0
    %v470 = vadd.f32 %v414, %v469
    %471 = vmatmul.f32.gmra.mxu0 %v61
    %v472 = vpop.f32.mrf.mxu0
    %v473 = vadd.f32 %v414, %v472
    %474 = vmatmul.f32.gmra.mxu0 %v62
    %v475 = vpop.f32.mrf.mxu0
    %v476 = vadd.f32 %v414, %v475
    %477 = vmatmul.f32.gmra.mxu0 %v63
    %v478 = vpop.f32.mrf.mxu0
    %v479 = vadd.f32 %v414, %v478
    %480 = vdwg.mxu0
    %v481 = vmax.f32 %v434, 0.0
    %v482 = vmax.f32 %v437, 0.0
    %v483 = vmax.f32 %v440, 0.0
    %v484 = vmax.f32 %v443, 0.0
    %v485 = vmax.f32 %v446, 0.0
    %v486 = vmax.f32 %v449, 0.0
    %v487 = vmax.f32 %v452, 0.0
    %v488 = vmax.f32 %v455, 0.0
    %v489 = vmax.f32 %v458, 0.0
    %v490 = vmax.f32 %v461, 0.0
    %v491 = vmax.f32 %v464, 0.0
    %v492 = vmax.f32 %v467, 0.0
    %v493 = vmax.f32 %v470, 0.0
    %v494 = vmax.f32 %v473, 0.0
    %v495 = vmax.f32 %v476, 0.0
    %v496 = vmax.f32 %v479, 0.0
    %v497 = vld [vmem:[%s9] sm:$0xff]
    %v498 = vld [vmem:[%s9 + $0x8] sm:$0xff]
    %v499 = vld [vmem:[%s9 + $0x10] sm:$0xff]
    %v500 = vld [vmem:[%s9 + $0x18] sm:$0xff]
    %v501 = vld [vmem:[%s9 + $0x20] sm:$0xff]
    %v502 = vld [vmem:[%s9 + $0x28] sm:$0xff]
    %v503 = vld [vmem:[%s9 + $0x30] sm:$0xff]
    %v504 = vld [vmem:[%s9 + $0x38] sm:$0xff]
    %v505 = vld [vmem:[%s9 + $0x40] sm:$0xff]
    %v506 = vld [vmem:[%s9 + $0x48] sm:$0xff]
    %v507 = vld [vmem:[%s9 + $0x50] sm:$0xff]
    %v508 = vld [vmem:[%s9 + $0x58] sm:$0xff]
    %v509 = vld [vmem:[%s9 + $0x60] sm:$0xff]
    %v510 = vld [vmem:[%s9 + $0x68] sm:$0xff]
    %v511 = vld [vmem:[%s9 + $0x70] sm:$0xff]
    %v512 = vld [vmem:[%s9 + $0x78] sm:$0xff]
    %v513 = vld [vmem:[%s10] sm:$0x1]
    %514 = vmatpush.msra.mxu0 %v512
    %515 = vmatpush.msra.mxu0 %v511
    %516 = vmatpush.msra.mxu0 %v510
    %517 = vmatpush.msra.mxu0 %v509
    %518 = vmatpush.msra.mxu0 %v508
    %519 = vmatpush.msra.mxu0 %v507
    %520 = vmatpush.msra.mxu0 %v506
    %521 = vmatpush.msra.mxu0 %v505
    %522 = vmatpush.msra.mxu0 %v504
    %523 = vmatpush.msra.mxu0 %v503
    %524 = vmatpush.msra.mxu0 %v502
    %525 = vmatpush.msra.mxu0 %v501
    %526 = vmatpush.msra.mxu0 %v500
    %527 = vmatpush.msra.mxu0 %v499
    %528 = vmatpush.msra.mxu0 %v498
    %529 = vmatpush.msra.mxu0 %v497
    %530 = vmatmul.f32.gmra.mxu0 %v481
    %v531 = vpop.f32.mrf.mxu0
    %v532 = vadd.f32 0.0, %v531
    %533 = vmatmul.f32.gmra.mxu0 %v482
    %v534 = vpop.f32.mrf.mxu0
    %v535 = vadd.f32 0.0, %v534
    %536 = vmatmul.f32.gmra.mxu0 %v483
    %v537 = vpop.f32.mrf.mxu0
    %v538 = vadd.f32 0.0, %v537
    %539 = vmatmul.f32.gmra.mxu0 %v484
    %v540 = vpop.f32.mrf.mxu0
    %v541 = vadd.f32 0.0, %v540
    %542 = vmatmul.f32.gmra.mxu0 %v485
    %v543 = vpop.f32.mrf.mxu0
    %v544 = vadd.f32 0.0, %v543
    %545 = vmatmul.f32.gmra.mxu0 %v486
    %v546 = vpop.f32.mrf.mxu0
    %v547 = vadd.f32 0.0, %v546
    %548 = vmatmul.f32.gmra.mxu0 %v487
    %v549 = vpop.f32.mrf.mxu0
    %v550 = vadd.f32 0.0, %v549
    %551 = vmatmul.f32.gmra.mxu0 %v488
    %v552 = vpop.f32.mrf.mxu0
    %v553 = vadd.f32 0.0, %v552
    %554 = vmatmul.f32.gmra.mxu0 %v489
    %v555 = vpop.f32.mrf.mxu0
    %v556 = vadd.f32 0.0, %v555
    %557 = vmatmul.f32.gmra.mxu0 %v490
    %v558 = vpop.f32.mrf.mxu0
    %v559 = vadd.f32 0.0, %v558
    %560 = vmatmul.f32.gmra.mxu0 %v491
    %v561 = vpop.f32.mrf.mxu0
    %v562 = vadd.f32 0.0, %v561
    %563 = vmatmul.f32.gmra.mxu0 %v492
    %v564 = vpop.f32.mrf.mxu0
    %v565 = vadd.f32 0.0, %v564
    %566 = vmatmul.f32.gmra.mxu0 %v493
    %v567 = vpop.f32.mrf.mxu0
    %v568 = vadd.f32 0.0, %v567
    %569 = vmatmul.f32.gmra.mxu0 %v494
    %v570 = vpop.f32.mrf.mxu0
    %v571 = vadd.f32 0.0, %v570
    %572 = vmatmul.f32.gmra.mxu0 %v495
    %v573 = vpop.f32.mrf.mxu0
    %v574 = vadd.f32 0.0, %v573
    %575 = vmatmul.f32.gmra.mxu0 %v496
    %v576 = vpop.f32.mrf.mxu0
    %v577 = vadd.f32 0.0, %v576
    %578 = vdwg.mxu0
    %v580 = vperm.slane %v513, 0
    %582 = vmatpush.msra.mxu0 %v577
    %583 = vmatpush.msra.mxu0 %v574
    %584 = vmatpush.msra.mxu0 %v571
    %585 = vmatpush.msra.mxu0 %v568
    %586 = vmatpush.msra.mxu0 %v565
    %587 = vmatpush.msra.mxu0 %v562
    %588 = vmatpush.msra.mxu0 %v559
    %589 = vmatpush.msra.mxu0 %v556
    %590 = vmatpush.msra.mxu0 %v553
    %591 = vmatpush.msra.mxu0 %v550
    %592 = vmatpush.msra.mxu0 %v547
    %593 = vmatpush.msra.mxu0 %v544
    %594 = vmatpush.msra.mxu0 %v541
    %595 = vmatpush.msra.mxu0 %v538
    %596 = vmatpush.msra.mxu0 %v535
    %597 = vmatpush.msra.mxu0 %v532
    %598 = vmatmul.f32.gmra.mxu0 %v48
    %v599 = vpop.f32.mrf.mxu0
    %v600 = vadd.f32 %v580, %v599
    %601 = vmatmul.f32.gmra.mxu0 %v49
    %v602 = vpop.f32.mrf.mxu0
    %v603 = vadd.f32 %v580, %v602
    %604 = vmatmul.f32.gmra.mxu0 %v50
    %v605 = vpop.f32.mrf.mxu0
    %v606 = vadd.f32 %v580, %v605
    %607 = vmatmul.f32.gmra.mxu0 %v51
    %v608 = vpop.f32.mrf.mxu0
    %v609 = vadd.f32 %v580, %v608
    %610 = vmatmul.f32.gmra.mxu0 %v52
    %v611 = vpop.f32.mrf.mxu0
    %v612 = vadd.f32 %v580, %v611
    %613 = vmatmul.f32.gmra.mxu0 %v53
    %v614 = vpop.f32.mrf.mxu0
    %v615 = vadd.f32 %v580, %v614
    %616 = vmatmul.f32.gmra.mxu0 %v54
    %v617 = vpop.f32.mrf.mxu0
    %v618 = vadd.f32 %v580, %v617
    %619 = vmatmul.f32.gmra.mxu0 %v55
    %v620 = vpop.f32.mrf.mxu0
    %v621 = vadd.f32 %v580, %v620
    %622 = vmatmul.f32.gmra.mxu0 %v56
    %v623 = vpop.f32.mrf.mxu0
    %v624 = vadd.f32 %v580, %v623
    %625 = vmatmul.f32.gmra.mxu0 %v57
    %v626 = vpop.f32.mrf.mxu0
    %v627 = vadd.f32 %v580, %v626
    %628 = vmatmul.f32.gmra.mxu0 %v58
    %v629 = vpop.f32.mrf.mxu0
    %v630 = vadd.f32 %v580, %v629
    %631 = vmatmul.f32.gmra.mxu0 %v59
    %v632 = vpop.f32.mrf.mxu0
    %v633 = vadd.f32 %v580, %v632
    %634 = vmatmul.f32.gmra.mxu0 %v60
    %v635 = vpop.f32.mrf.mxu0
    %v636 = vadd.f32 %v580, %v635
    %637 = vmatmul.f32.gmra.mxu0 %v61
    %v638 = vpop.f32.mrf.mxu0
    %v639 = vadd.f32 %v580, %v638
    %640 = vmatmul.f32.gmra.mxu0 %v62
    %v641 = vpop.f32.mrf.mxu0
    %v642 = vadd.f32 %v580, %v641
    %643 = vmatmul.f32.gmra.mxu0 %v63
    %v644 = vpop.f32.mrf.mxu0
    %v645 = vadd.f32 %v580, %v644
    %646 = vdwg.mxu0
    %v647 = vmax.f32 %v600, 0.0
    %v648 = vmax.f32 %v603, 0.0
    %v649 = vmax.f32 %v606, 0.0
    %v650 = vmax.f32 %v609, 0.0
    %v651 = vmax.f32 %v612, 0.0
    %v652 = vmax.f32 %v615, 0.0
    %v653 = vmax.f32 %v618, 0.0
    %v654 = vmax.f32 %v621, 0.0
    %v655 = vmax.f32 %v624, 0.0
    %v656 = vmax.f32 %v627, 0.0
    %v657 = vmax.f32 %v630, 0.0
    %v658 = vmax.f32 %v633, 0.0
    %v659 = vmax.f32 %v636, 0.0
    %v660 = vmax.f32 %v639, 0.0
    %v661 = vmax.f32 %v642, 0.0
    %v662 = vmax.f32 %v645, 0.0
    %v663 = vld [vmem:[%s11] sm:$0xff]
    %v664 = vld [vmem:[%s11 + $0x8] sm:$0xff]
    %v665 = vld [vmem:[%s11 + $0x10] sm:$0xff]
    %v666 = vld [vmem:[%s11 + $0x18] sm:$0xff]
    %v667 = vld [vmem:[%s11 + $0x20] sm:$0xff]
    %v668 = vld [vmem:[%s11 + $0x28] sm:$0xff]
    %v669 = vld [vmem:[%s11 + $0x30] sm:$0xff]
    %v670 = vld [vmem:[%s11 + $0x38] sm:$0xff]
    %v671 = vld [vmem:[%s11 + $0x40] sm:$0xff]
    %v672 = vld [vmem:[%s11 + $0x48] sm:$0xff]
    %v673 = vld [vmem:[%s11 + $0x50] sm:$0xff]
    %v674 = vld [vmem:[%s11 + $0x58] sm:$0xff]
    %v675 = vld [vmem:[%s11 + $0x60] sm:$0xff]
    %v676 = vld [vmem:[%s11 + $0x68] sm:$0xff]
    %v677 = vld [vmem:[%s11 + $0x70] sm:$0xff]
    %v678 = vld [vmem:[%s11 + $0x78] sm:$0xff]
    %v679 = vld [vmem:[%s12] sm:$0x1]
    %680 = vmatpush.msra.mxu0 %v678
    %681 = vmatpush.msra.mxu0 %v677
    %682 = vmatpush.msra.mxu0 %v676
    %683 = vmatpush.msra.mxu0 %v675
    %684 = vmatpush.msra.mxu0 %v674
    %685 = vmatpush.msra.mxu0 %v673
    %686 = vmatpush.msra.mxu0 %v672
    %687 = vmatpush.msra.mxu0 %v671
    %688 = vmatpush.msra.mxu0 %v670
    %689 = vmatpush.msra.mxu0 %v669
    %690 = vmatpush.msra.mxu0 %v668
    %691 = vmatpush.msra.mxu0 %v667
    %692 = vmatpush.msra.mxu0 %v666
    %693 = vmatpush.msra.mxu0 %v665
    %694 = vmatpush.msra.mxu0 %v664
    %695 = vmatpush.msra.mxu0 %v663
    %696 = vmatmul.f32.gmra.mxu0 %v647
    %v697 = vpop.f32.mrf.mxu0
    %v698 = vadd.f32 0.0, %v697
    %699 = vmatmul.f32.gmra.mxu0 %v648
    %v700 = vpop.f32.mrf.mxu0
    %v701 = vadd.f32 0.0, %v700
    %702 = vmatmul.f32.gmra.mxu0 %v649
    %v703 = vpop.f32.mrf.mxu0
    %v704 = vadd.f32 0.0, %v703
    %705 = vmatmul.f32.gmra.mxu0 %v650
    %v706 = vpop.f32.mrf.mxu0
    %v707 = vadd.f32 0.0, %v706
    %708 = vmatmul.f32.gmra.mxu0 %v651
    %v709 = vpop.f32.mrf.mxu0
    %v710 = vadd.f32 0.0, %v709
    %711 = vmatmul.f32.gmra.mxu0 %v652
    %v712 = vpop.f32.mrf.mxu0
    %v713 = vadd.f32 0.0, %v712
    %714 = vmatmul.f32.gmra.mxu0 %v653
    %v715 = vpop.f32.mrf.mxu0
    %v716 = vadd.f32 0.0, %v715
    %717 = vmatmul.f32.gmra.mxu0 %v654
    %v718 = vpop.f32.mrf.mxu0
    %v719 = vadd.f32 0.0, %v718
    %720 = vmatmul.f32.gmra.mxu0 %v655
    %v721 = vpop.f32.mrf.mxu0
    %v722 = vadd.f32 0.0, %v721
    %723 = vmatmul.f32.gmra.mxu0 %v656
    %v724 = vpop.f32.mrf.mxu0
    %v725 = vadd.f32 0.0, %v724
    %726 = vmatmul.f32.gmra.mxu0 %v657
    %v727 = vpop.f32.mrf.mxu0
    %v728 = vadd.f32 0.0, %v727
    %729 = vmatmul.f32.gmra.mxu0 %v658
    %v730 = vpop.f32.mrf.mxu0
    %v731 = vadd.f32 0.0, %v730
    %732 = vmatmul.f32.gmra.mxu0 %v659
    %v733 = vpop.f32.mrf.mxu0
    %v734 = vadd.f32 0.0, %v733
    %735 = vmatmul.f32.gmra.mxu0 %v660
    %v736 = vpop.f32.mrf.mxu0
    %v737 = vadd.f32 0.0, %v736
    %738 = vmatmul.f32.gmra.mxu0 %v661
    %v739 = vpop.f32.mrf.mxu0
    %v740 = vadd.f32 0.0, %v739
    %741 = vmatmul.f32.gmra.mxu0 %v662
    %v742 = vpop.f32.mrf.mxu0
    %v743 = vadd.f32 0.0, %v742
    %744 = vdwg.mxu0
    %v746 = vperm.slane %v679, 0
    %748 = vmatpush.msra.mxu0 %v743
    %749 = vmatpush.msra.mxu0 %v740
    %750 = vmatpush.msra.mxu0 %v737
    %751 = vmatpush.msra.mxu0 %v734
    %752 = vmatpush.msra.mxu0 %v731
    %753 = vmatpush.msra.mxu0 %v728
    %754 = vmatpush.msra.mxu0 %v725
    %755 = vmatpush.msra.mxu0 %v722
    %756 = vmatpush.msra.mxu0 %v719
    %757 = vmatpush.msra.mxu0 %v716
    %758 = vmatpush.msra.mxu0 %v713
    %759 = vmatpush.msra.mxu0 %v710
    %760 = vmatpush.msra.mxu0 %v707
    %761 = vmatpush.msra.mxu0 %v704
    %762 = vmatpush.msra.mxu0 %v701
    %763 = vmatpush.msra.mxu0 %v698
    %764 = vmatmul.f32.gmra.mxu0 %v48
    %v765 = vpop.f32.mrf.mxu0
    %v766 = vadd.f32 %v746, %v765
    %767 = vmatmul.f32.gmra.mxu0 %v49
    %v768 = vpop.f32.mrf.mxu0
    %v769 = vadd.f32 %v746, %v768
    %770 = vmatmul.f32.gmra.mxu0 %v50
    %v771 = vpop.f32.mrf.mxu0
    %v772 = vadd.f32 %v746, %v771
    %773 = vmatmul.f32.gmra.mxu0 %v51
    %v774 = vpop.f32.mrf.mxu0
    %v775 = vadd.f32 %v746, %v774
    %776 = vmatmul.f32.gmra.mxu0 %v52
    %v777 = vpop.f32.mrf.mxu0
    %v778 = vadd.f32 %v746, %v777
    %779 = vmatmul.f32.gmra.mxu0 %v53
    %v780 = vpop.f32.mrf.mxu0
    %v781 = vadd.f32 %v746, %v780
    %782 = vmatmul.f32.gmra.mxu0 %v54
    %v783 = vpop.f32.mrf.mxu0
    %v784 = vadd.f32 %v746, %v783
    %785 = vmatmul.f32.gmra.mxu0 %v55
    %v786 = vpop.f32.mrf.mxu0
    %v787 = vadd.f32 %v746, %v786
    %788 = vmatmul.f32.gmra.mxu0 %v56
    %v789 = vpop.f32.mrf.mxu0
    %v790 = vadd.f32 %v746, %v789
    %791 = vmatmul.f32.gmra.mxu0 %v57
    %v792 = vpop.f32.mrf.mxu0
    %v793 = vadd.f32 %v746, %v792
    %794 = vmatmul.f32.gmra.mxu0 %v58
    %v795 = vpop.f32.mrf.mxu0
    %v796 = vadd.f32 %v746, %v795
    %797 = vmatmul.f32.gmra.mxu0 %v59
    %v798 = vpop.f32.mrf.mxu0
    %v799 = vadd.f32 %v746, %v798
    %800 = vmatmul.f32.gmra.mxu0 %v60
    %v801 = vpop.f32.mrf.mxu0
    %v802 = vadd.f32 %v746, %v801
    %803 = vmatmul.f32.gmra.mxu0 %v61
    %v804 = vpop.f32.mrf.mxu0
    %v805 = vadd.f32 %v746, %v804
    %806 = vmatmul.f32.gmra.mxu0 %v62
    %v807 = vpop.f32.mrf.mxu0
    %v808 = vadd.f32 %v746, %v807
    %809 = vmatmul.f32.gmra.mxu0 %v63
    %v810 = vpop.f32.mrf.mxu0
    %v811 = vadd.f32 %v746, %v810
    %812 = vdwg.mxu0
    %v813 = vmax.f32 %v766, 0.0
    %v814 = vmax.f32 %v769, 0.0
    %v815 = vmax.f32 %v772, 0.0
    %v816 = vmax.f32 %v775, 0.0
    %v817 = vmax.f32 %v778, 0.0
    %v818 = vmax.f32 %v781, 0.0
    %v819 = vmax.f32 %v784, 0.0
    %v820 = vmax.f32 %v787, 0.0
    %v821 = vmax.f32 %v790, 0.0
    %v822 = vmax.f32 %v793, 0.0
    %v823 = vmax.f32 %v796, 0.0
    %v824 = vmax.f32 %v799, 0.0
    %v825 = vmax.f32 %v802, 0.0
    %v826 = vmax.f32 %v805, 0.0
    %v827 = vmax.f32 %v808, 0.0
    %v828 = vmax.f32 %v811, 0.0
    %v829 = vld [vmem:[%s2] sm:$0x3]
    %830 = vmatpush.msra.mxu0 %v828
    %831 = vmatpush.msra.mxu0 %v827
    %832 = vmatpush.msra.mxu0 %v826
    %833 = vmatpush.msra.mxu0 %v825
    %834 = vmatpush.msra.mxu0 %v824
    %835 = vmatpush.msra.mxu0 %v823
    %836 = vmatpush.msra.mxu0 %v822
    %837 = vmatpush.msra.mxu0 %v821
    %838 = vmatpush.msra.mxu0 %v820
    %839 = vmatpush.msra.mxu0 %v819
    %840 = vmatpush.msra.mxu0 %v818
    %841 = vmatpush.msra.mxu0 %v817
    %842 = vmatpush.msra.mxu0 %v816
    %843 = vmatpush.msra.mxu0 %v815
    %844 = vmatpush.msra.mxu0 %v814
    %845 = vmatpush.msra.mxu0 %v813
    %846 = vmatmul.f32.gmra.mxu0 %v829
    %v847 = vpop.f32.mrf.mxu0
    %v848 = vadd.f32 0.0, %v847
    %849 = vdwg.mxu0
    %v850 = vld [vmem:[%s13] sm:$0xff]
    %v851 = vld [vmem:[%s13 + $0x8] sm:$0xff]
    %v852 = vld [vmem:[%s13 + $0x10] sm:$0xff]
    %v853 = vld [vmem:[%s13 + $0x18] sm:$0xff]
    %v854 = vld [vmem:[%s13 + $0x20] sm:$0xff]
    %v855 = vld [vmem:[%s13 + $0x28] sm:$0xff]
    %v856 = vld [vmem:[%s13 + $0x30] sm:$0xff]
    %v857 = vld [vmem:[%s13 + $0x38] sm:$0xff]
    %v858 = vld [vmem:[%s13 + $0x40] sm:$0xff]
    %v859 = vld [vmem:[%s13 + $0x48] sm:$0xff]
    %v860 = vld [vmem:[%s13 + $0x50] sm:$0xff]
    %v861 = vld [vmem:[%s13 + $0x58] sm:$0xff]
    %v862 = vld [vmem:[%s13 + $0x60] sm:$0xff]
    %v863 = vld [vmem:[%s13 + $0x68] sm:$0xff]
    %v864 = vld [vmem:[%s13 + $0x70] sm:$0xff]
    %v865 = vld [vmem:[%s13 + $0x78] sm:$0xff]
    %v866 = vld [vmem:[%s13 + $0x80] sm:$0xff]
    %v867 = vld [vmem:[%s13 + $0x88] sm:$0xff]
    %v868 = vld [vmem:[%s13 + $0x90] sm:$0xff]
    %v869 = vld [vmem:[%s13 + $0x98] sm:$0xff]
    %v870 = vld [vmem:[%s13 + $0xa0] sm:$0xff]
    %v871 = vld [vmem:[%s13 + $0xa8] sm:$0xff]
    %v872 = vld [vmem:[%s13 + $0xb0] sm:$0xff]
    %v873 = vld [vmem:[%s13 + $0xb8] sm:$0xff]
    %v874 = vld [vmem:[%s13 + $0xc0] sm:$0xff]
    %v875 = vld [vmem:[%s13 + $0xc8] sm:$0xff]
    %v876 = vld [vmem:[%s13 + $0xd0] sm:$0xff]
    %v877 = vld [vmem:[%s13 + $0xd8] sm:$0xff]
    %v878 = vld [vmem:[%s13 + $0xe0] sm:$0xff]
    %v879 = vld [vmem:[%s13 + $0xe8] sm:$0xff]
    %v880 = vld [vmem:[%s13 + $0xf0] sm:$0xff]
    %v881 = vld [vmem:[%s13 + $0xf8] sm:$0xff]
    %882 = vmatpush.msra.mxu0 %v880
    %883 = vmatpush.msra.mxu0 %v878
    %884 = vmatpush.msra.mxu0 %v876
    %885 = vmatpush.msra.mxu0 %v874
    %886 = vmatpush.msra.mxu0 %v872
    %887 = vmatpush.msra.mxu0 %v870
    %888 = vmatpush.msra.mxu0 %v868
    %889 = vmatpush.msra.mxu0 %v866
    %890 = vmatpush.msra.mxu0 %v864
    %891 = vmatpush.msra.mxu0 %v862
    %892 = vmatpush.msra.mxu0 %v860
    %893 = vmatpush.msra.mxu0 %v858
    %894 = vmatpush.msra.mxu0 %v856
    %895 = vmatpush.msra.mxu0 %v854
    %896 = vmatpush.msra.mxu0 %v852
    %897 = vmatpush.msra.mxu0 %v850
    %898 = vmatmul.f32.gmra.mxu0 %v848
    %v899 = vpop.f32.mrf.mxu0
    %v900 = vadd.f32 0.0, %v899
    %901 = vdwg.mxu0
    %902 = vmatpush.msra.mxu0 %v881
    %903 = vmatpush.msra.mxu0 %v879
    %904 = vmatpush.msra.mxu0 %v877
    %905 = vmatpush.msra.mxu0 %v875
    %906 = vmatpush.msra.mxu0 %v873
    %907 = vmatpush.msra.mxu0 %v871
    %908 = vmatpush.msra.mxu0 %v869
    %909 = vmatpush.msra.mxu0 %v867
    %910 = vmatpush.msra.mxu0 %v865
    %911 = vmatpush.msra.mxu0 %v863
    %912 = vmatpush.msra.mxu0 %v861
    %913 = vmatpush.msra.mxu0 %v859
    %914 = vmatpush.msra.mxu0 %v857
    %915 = vmatpush.msra.mxu0 %v855
    %916 = vmatpush.msra.mxu0 %v853
    %917 = vmatpush.msra.mxu0 %v851
    %918 = vmatmul.f32.gmra.mxu0 %v848
    %v919 = vpop.f32.mrf.mxu0
    %v920 = vadd.f32 0.0, %v919
    %921 = vdwg.mxu0
    %v924 = vrot.slane %v920, 6
    %vm925 = vcmask 1041408
    %v926 = vsel %vm925, %v900, %v924
    %928 = vst [vmem:[#allocation2] sm:$0xf] %v926
    // Predicated region
    $region58: #{gcnnet2_forward.1} parent=1 // pred_check
      _
    $region59: #{gcnnet2_forward.1} parent=1 // pred_check_branch
      %930 = sbr.rel (0) target = $region61
    $region60: #{gcnnet2_forward.1} parent=1 // pred_region
      %932 = vsyncadd [#allocation3], 0
      %s934 = sshll.u32 [#allocation2], 4
      %s935 = int_to_ptr.vmem [resolvable:$true] %s934
      %s936 = sshll.u32 %s14, 4
      %s937 = int_to_ptr.hbm [resolvable:$true] %s936
      %939 = dma.vmem_to_hbm [thread:$0]  %s935, 64, %s937, [#allocation3]
    $region61: #{gcnnet2_forward.1} parent=1 // pred_fallthru
      _
    // Predicated region
    $region62: #{gcnnet2_forward.1} parent=1 // pred_check
      _
    $region63: #{gcnnet2_forward.1} parent=1 // pred_check_branch
      %941 = sbr.rel (0) target = $region65
    $region64: #{gcnnet2_forward.1} parent=1 // pred_region
      %943 = dma.done [#allocation3], 64
    $region65: #{gcnnet2_forward.1} parent=1 // pred_fallthru
      _
    %944 = vsyncpa [#allocation3], 1

</llo_original>
